<compile_context>
chip_gen: v7x
topology: tpu7x:2x2x1
jax: 0.10.0
libtpu: 0.0.40
codegen_flags: <defaults>
</compile_context>

<pallas_src>
import jax
import jax.numpy as jnp
from jax.experimental import pallas as pl
from jax.experimental.pallas import tpu as pltpu


def _consequence_kernel(x_ref, wnorm_ref, w_ref, e_ref, b_ref, out_ref):
    # x_ref:     (tb, k*N)    k batch rows folded per lane row
    # wnorm_ref: (tb, k*R)    normalized rule firing strengths (folded)
    # w_ref:     (k*N, k*RC)  block-diagonal effective weights  kron(I_k, s ⊙ W)
    # e_ref:     (k*R, k*RC)  block-diagonal one-hot class-broadcast matrix
    # b_ref:     (1,  k*RC)   biases tiled k times along lanes
    # out_ref:   (tb, k*RC)   lane-dense output tile
    acc = jnp.dot(x_ref[...], w_ref[...],
                  preferred_element_type=jnp.float32)      # (tb, k*RC)
    wn = jnp.dot(wnorm_ref[...], e_ref[...],
                 preferred_element_type=jnp.float32)       # (tb, k*RC)
    out = wn * (acc + b_ref[...].astype(jnp.float32))
    out_ref[...] = out.astype(out_ref.dtype)


def consequence_layer(input_, wnorm, s, weights, biases, *, tile_b=None):
    """Pallas implementation of _ConsequenceLayer.forward.

    input_: (B, N), wnorm: (B, R), s: (N, R)
    weights: (N, R, C), biases: (1, R, C)
    returns: (B, R, C)
    """
    B, N = input_.shape
    R = wnorm.shape[-1]
    C = weights.shape[-1]
    RC = R * C

    # ---- Glue: weight-sized ops + zero-cost contiguous reshapes only ----
    # Hoisted grid-invariant scaling: w_eff[n, r*C + c] = s[n, r] * weights[n, r, c]
    w_eff = (s[:, :, None] * weights).reshape(N, RC)
    b2d = biases.reshape(1, RC)
    # One-hot expansion broadcasting a (.., R) array over classes (class-minor):
    # expand[r, r*C + c] = 1.
    expand = jnp.kron(jnp.eye(R, dtype=w_eff.dtype), jnp.ones((1, C), w_eff.dtype))

    # Batch fold factor: k rows per lane row so the output lane width k*RC ~ 128.
    cand = max(1, 128 // RC) if RC < 128 else 1
    k = 1
    for kk in range(cand, 0, -1):
        if B % kk == 0:
            k = kk
            break

    kN, kR, kRC = k * N, k * R, k * RC
    Bf = B // k

    if k > 1:
        eye_k = jnp.eye(k, dtype=w_eff.dtype)
        w_blk = jnp.kron(eye_k, w_eff)           # (k*N, k*RC) block-diagonal
        e_blk = jnp.kron(eye_k, expand)          # (k*R, k*RC) block-diagonal
        b_blk = jnp.tile(b2d, (1, k))            # (1,  k*RC)
    else:
        w_blk, e_blk, b_blk = w_eff, expand, b2d

    xf = input_.reshape(Bf, kN)                  # contiguous reshape (free)
    wnf = wnorm.reshape(Bf, kR)                  # contiguous reshape (free)

    # ---- Batch tile from a VMEM budget (no hard 512 cap) ----
    out_bytes = jnp.dtype(input_.dtype).itemsize
    in_bytes = jnp.dtype(input_.dtype).itemsize
    row_bytes = (kN + kR) * in_bytes + kRC * out_bytes
    if tile_b is None:
        budget = 4 << 20                          # per-block bytes for x+wnorm+out
        tile_b = min(Bf, max(8, budget // max(row_bytes, 1)))
        if tile_b < Bf:
            tile_b = max(8, (tile_b // 8) * 8)    # keep (8,128) block constraint
        # If everything fits in one step but the batch is sizable, split into
        # >= 2 tiles so the "parallel" axis shards across both TCs on v7x.
        if tile_b >= Bf and Bf >= 16:
            half = ((-(-Bf // 2)) + 7) // 8 * 8
            if half < Bf:
                tile_b = half
    grid_b = pl.cdiv(Bf, tile_b)

    # vmem_limit: double-buffered batch blocks + resident weight blocks + margin,
    # capped at 32 MiB (safe under v7x's 64 MiB physical VMEM).
    const_bytes = (kN * kRC + kR * kRC + kRC) * jnp.dtype(w_blk.dtype).itemsize
    vmem_limit = int(min(32 << 20,
                         max(16 << 20,
                             4 * tile_b * row_bytes + 4 * const_bytes + (2 << 20))))

    out2d = pl.pallas_call(
        _consequence_kernel,
        out_shape=jax.ShapeDtypeStruct((Bf, kRC), input_.dtype),
        grid_spec=pltpu.PrefetchScalarGridSpec(
            num_scalar_prefetch=0,
            grid=(grid_b,),
            in_specs=[
                pl.BlockSpec((tile_b, kN), lambda i: (i, 0)),   # x (folded), batch-tiled
                pl.BlockSpec((tile_b, kR), lambda i: (i, 0)),   # wnorm (folded), batch-tiled
                pl.BlockSpec((kN, kRC), lambda i: (0, 0)),      # block-diag weights, resident
                pl.BlockSpec((kR, kRC), lambda i: (0, 0)),      # block-diag expand, resident
                pl.BlockSpec((1, kRC), lambda i: (0, 0)),       # tiled biases, resident
            ],
            out_specs=pl.BlockSpec((tile_b, kRC), lambda i: (i, 0)),
        ),
        compiler_params=pltpu.CompilerParams(
            dimension_semantics=("parallel",),
            vmem_limit_bytes=vmem_limit),
    )(xf, wnf, w_blk, e_blk, b_blk)

    # Glue: free contiguous reshape back to PyTorch's (B, R, C).
    return out2d.reshape(B, R, C)


def consequence_layer_ref(input_, wnorm, s, weights, biases):
    """Pure-JAX reference with exact PyTorch semantics."""
    scaled_w = s[:, :, None] * weights                                # (N, R, C)
    proj = jnp.einsum('ij,jkl->ikl', input_, scaled_w) + biases       # (B, R, C)
    return wnorm[:, :, None] * proj


if __name__ == "__main__":
    # Small shapes consistent with the module.
    B, N, R, C = 8, 16, 8, 4   # batch, n_input, n_rules, n_classes

    key = jax.random.PRNGKey(0)
    k_w, k_b, k_x, k_wn, k_s = jax.random.split(key, 5)

    # Deterministic params mimicking reset_parameters(): U[0,1) - 0.5
    weights = jax.random.uniform(k_w, (N, R, C), jnp.float32) - 0.5
    biases = jax.random.uniform(k_b, (1, R, C), jnp.float32) - 0.5

    # Example inputs.
    x = jax.random.normal(k_x, (B, N), jnp.float32)
    wnorm_raw = jax.random.uniform(k_wn, (B, R), jnp.float32) + 1e-3
    wnorm = wnorm_raw / jnp.sum(wnorm_raw, axis=1, keepdims=True)
    s = jax.random.uniform(k_s, (N, R), jnp.float32)   # feature-selection scales

    out = jax.block_until_ready(consequence_layer(x, wnorm, s, weights, biases))
    ref = consequence_layer_ref(x, wnorm, s, weights, biases)
    assert out.shape == (B, R, C), out.shape
    assert jnp.allclose(out, ref, atol=1e-5, rtol=1e-5), \
        float(jnp.max(jnp.abs(out - ref)))

    # Larger batch: exercises batch-folding, multi-tile grid and a partial
    # last block (padded tail rows are discarded by the output BlockSpec).
    B2 = 1000
    x2 = jax.random.normal(jax.random.PRNGKey(1), (B2, N), jnp.float32)
    wn2 = jax.random.uniform(jax.random.PRNGKey(2), (B2, R), jnp.float32) + 1e-3
    wn2 = wn2 / jnp.sum(wn2, axis=1, keepdims=True)
    out2 = jax.block_until_ready(consequence_layer(x2, wn2, s, weights, biases))
    ref2 = consequence_layer_ref(x2, wn2, s, weights, biases)
    assert out2.shape == (B2, R, C), out2.shape
    assert jnp.allclose(out2, ref2, atol=1e-5, rtol=1e-5), \
        float(jnp.max(jnp.abs(out2 - ref2)))

    print("KERNEL_OK")
</pallas_src>

<mosaic_0001>
module attributes {stable_mosaic.version = 11 : i64} {
  func.func @_consequence_kernel(%arg0: i32, %arg1: memref<2x64xf32, #tpu.memory_space<vmem>>, %arg2: memref<2x32xf32, #tpu.memory_space<vmem>>, %arg3: memref<64x128xf32, #tpu.memory_space<vmem>>, %arg4: memref<32x128xf32, #tpu.memory_space<vmem>>, %arg5: memref<1x128xf32, #tpu.memory_space<vmem>>, %arg6: memref<2x128xf32, #tpu.memory_space<vmem>>) attributes {dimension_semantics = [#tpu.dimension_semantics<parallel>], iteration_bounds = array<i64: 1>, scalar_prefetch = 0 : i64, scratch_operands = 0 : i64, tpu.core_type = #tpu.core_type<tc>, window_params = [{transform_indices = @transform_0, window_bounds = array<i64: 2, 64>}, {transform_indices = @transform_1, window_bounds = array<i64: 2, 32>}, {pipeline_mode = #tpu.pipeline_mode<synchronous>, transform_indices = @transform_2, window_bounds = array<i64: 64, 128>}, {pipeline_mode = #tpu.pipeline_mode<synchronous>, transform_indices = @transform_3, window_bounds = array<i64: 32, 128>}, {pipeline_mode = #tpu.pipeline_mode<synchronous>, transform_indices = @transform_4, window_bounds = array<i64: 1, 128>}, {transform_indices = @transform_5, window_bounds = array<i64: 2, 128>}]} {
    %c0 = arith.constant 0 : index
    %c0_0 = arith.constant 0 : index
    %0 = vector.load %arg1[%c0, %c0_0] : memref<2x64xf32, #tpu.memory_space<vmem>>, vector<2x64xf32>
    %c0_1 = arith.constant 0 : index
    %c0_2 = arith.constant 0 : index
    %1 = vector.load %arg3[%c0_1, %c0_2] : memref<64x128xf32, #tpu.memory_space<vmem>>, vector<64x128xf32>
    %cst = arith.constant dense<0.000000e+00> : vector<2x128xf32>
    %2 = tpu.matmul %0, %1, %cst {dimension_numbers = #tpu.dot_dimension_numbers<[1], [0], [0], [1], [0, 0, 1, 1], [], []>} : vector<2x64xf32>, vector<64x128xf32>, vector<2x128xf32> -> vector<2x128xf32>
    %c0_3 = arith.constant 0 : index
    %c0_4 = arith.constant 0 : index
    %3 = vector.load %arg2[%c0_3, %c0_4] : memref<2x32xf32, #tpu.memory_space<vmem>>, vector<2x32xf32>
    %c0_5 = arith.constant 0 : index
    %c0_6 = arith.constant 0 : index
    %4 = vector.load %arg4[%c0_5, %c0_6] : memref<32x128xf32, #tpu.memory_space<vmem>>, vector<32x128xf32>
    %cst_7 = arith.constant dense<0.000000e+00> : vector<2x128xf32>
    %5 = tpu.matmul %3, %4, %cst_7 {dimension_numbers = #tpu.dot_dimension_numbers<[1], [0], [0], [1], [0, 0, 1, 1], [], []>} : vector<2x32xf32>, vector<32x128xf32>, vector<2x128xf32> -> vector<2x128xf32>
    %c0_8 = arith.constant 0 : index
    %c0_9 = arith.constant 0 : index
    %6 = vector.load %arg5[%c0_8, %c0_9] : memref<1x128xf32, #tpu.memory_space<vmem>>, vector<1x128xf32>
    %7 = vector.broadcast %6 : vector<1x128xf32> to vector<2x128xf32>
    %8 = arith.addf %2, %7 : vector<2x128xf32>
    %9 = arith.mulf %5, %8 : vector<2x128xf32>
    %c0_10 = arith.constant 0 : index
    %c0_11 = arith.constant 0 : index
    %10 = vector.load %arg6[%c0_10, %c0_11] : memref<2x128xf32, #tpu.memory_space<vmem>>, vector<2x128xf32>
    tpu.vector_store %arg6[%c0_10, %c0_11], %9 {strides = array<i32>} : memref<2x128xf32, #tpu.memory_space<vmem>>, vector<2x128xf32>,
    return
  }
  func.func @transform_0(%arg0: i32) -> (i32, i32) {
    %c0_i32 = arith.constant 0 : i32
    %c0_i32_0 = arith.constant 0 : i32
    return %arg0, %c0_i32 : i32, i32
  }
  func.func @transform_1(%arg0: i32) -> (i32, i32) {
    %c0_i32 = arith.constant 0 : i32
    %c0_i32_0 = arith.constant 0 : i32
    return %arg0, %c0_i32 : i32, i32
  }
  func.func @transform_2(%arg0: i32) -> (i32, i32) {
    %c0_i32 = arith.constant 0 : i32
    %c0_i32_0 = arith.constant 0 : i32
    %c0_i32_1 = arith.constant 0 : i32
    return %c0_i32, %c0_i32_0 : i32, i32
  }
  func.func @transform_3(%arg0: i32) -> (i32, i32) {
    %c0_i32 = arith.constant 0 : i32
    %c0_i32_0 = arith.constant 0 : i32
    %c0_i32_1 = arith.constant 0 : i32
    return %c0_i32, %c0_i32_0 : i32, i32
  }
  func.func @transform_4(%arg0: i32) -> (i32, i32) {
    %c0_i32 = arith.constant 0 : i32
    %c0_i32_0 = arith.constant 0 : i32
    %c0_i32_1 = arith.constant 0 : i32
    return %c0_i32, %c0_i32_0 : i32, i32
  }
  func.func @transform_5(%arg0: i32) -> (i32, i32) {
    %c0_i32 = arith.constant 0 : i32
    %c0_i32_0 = arith.constant 0 : i32
    return %arg0, %c0_i32 : i32, i32
  }
}

</mosaic_0001>

<llo_original>
// kernel: tpu_custom_call.1
$region0: #{tpu_custom_call.1}
  #allocation0 [shape = 'u32[]', space=smem, size = 0x4, offset = 0x4, fixed_abs, tag = 'smem constant byte address 0x4 - core index']
  #allocation1 [shape = 'u32[144,128]{1,0:T(1,128)}', space=vmem, size = 0x12000, scoped, tag = 'internal scratch']
  %s0 = inlined_call_operand.hbm [shape: f32[2,64], index: 0, kind: input, shape index: {}]
  %s1 = inlined_call_operand.vmem [shape: f32[2,32], index: 1, kind: input, shape index: {}]
  %s2 = inlined_call_operand.hbm [shape: f32[64,128], index: 2, kind: input, shape index: {}]
  %s3 = inlined_call_operand.hbm [shape: f32[32,128], index: 3, kind: input, shape index: {}]
  %s4 = inlined_call_operand.vmem [shape: f32[1,128], index: 4, kind: input, shape index: {}]
  %s5 = inlined_call_operand.hbm [shape: f32[2,128], index: 5, kind: output, shape index: {}]
  %s6 = sld [smem:[#allocation0]]
  $region42: #{tpu_custom_call.1} parent=0
    _
  %s8 = ssub.s32 1, %s6
  %s9 = scalar_select 0, %s8, %s6
  $region1: #{tpu_custom_call.1} parent=0
    #allocation2 [shape = 'u8[1024]{0}', space=vmem, size = 0x400, scoped, tag = 'input window, operand 0, single buffered']
    #allocation3 [shape = 's32[1]{0}', space=sflag, size = 0x4, scoped, tag = 'scoped memory for tpu_custom_call.1']
    #allocation4 [shape = 's32[1]{0}', space=sflag, size = 0x4, scoped, tag = 'scoped memory for tpu_custom_call.1']
    #allocation5 [shape = 'u8[32768]{0}', space=vmem, size = 0x8000, scoped, tag = 'input window, operand 2, single buffered']
    #allocation6 [shape = 's32[1]{0}', space=sflag, size = 0x4, scoped, tag = 'scoped memory for tpu_custom_call.1']
    #allocation7 [shape = 'u8[16384]{0}', space=vmem, size = 0x4000, scoped, tag = 'input window, operand 3, single buffered']
    #allocation8 [shape = 'u8[1024]{0}', space=vmem, size = 0x400, scoped, tag = 'output window, operand 0, single buffered']
    %10 = vsyncpa [#allocation3], 0
    %11 = vsyncpa [#allocation6], 0
    %12 = vsyncpa [#allocation4], 0
    // Predicated region
    $region2: #{tpu_custom_call.1} parent=1 // pred_check
      _
    $region3: #{tpu_custom_call.1} parent=1 // pred_check_branch
      %14 = sbr.rel (0) target = $region5
    $region4: #{tpu_custom_call.1} parent=1 // pred_region
      %s16 = ssub.s32 32, 32
      %17 = vsyncadd [#allocation3], %s16
      %s19 = sshll.u32 [#allocation2], 4
      %s20 = int_to_ptr.vmem [resolvable:$true] %s19
      %22 = dma.hbm_to_vmem [thread:$0]  %s0, 32, %s20, [#allocation3]
    $region5: #{tpu_custom_call.1} parent=1 // pred_fallthru
      _
    // Predicated region
    $region6: #{tpu_custom_call.1} parent=1 // pred_check
      _
    $region7: #{tpu_custom_call.1} parent=1 // pred_check_branch
      %24 = sbr.rel (0) target = $region9
    $region8: #{tpu_custom_call.1} parent=1 // pred_region
      _
    $region9: #{tpu_custom_call.1} parent=1 // pred_fallthru
      _
    // Predicated region
    $region10: #{tpu_custom_call.1} parent=1 // pred_check
      _
    $region11: #{tpu_custom_call.1} parent=1 // pred_check_branch
      %26 = sbr.rel (0) target = $region13
    $region12: #{tpu_custom_call.1} parent=1 // pred_region
      %s28 = ssub.s32 1024, 1024
      %29 = vsyncadd [#allocation6], %s28
      %s30 = sshll.u32 [#allocation5], 4
      %s31 = int_to_ptr.vmem [resolvable:$true] %s30
      %36 = dma.hbm_to_vmem [thread:$0]  %s2, 1024, %s31, [#allocation6], 128, 128, 8
    $region13: #{tpu_custom_call.1} parent=1 // pred_fallthru
      _
    // Predicated region
    $region14: #{tpu_custom_call.1} parent=1 // pred_check
      _
    $region15: #{tpu_custom_call.1} parent=1 // pred_check_branch
      %38 = sbr.rel (0) target = $region17
    $region16: #{tpu_custom_call.1} parent=1 // pred_region
      %s40 = ssub.s32 512, 512
      %41 = vsyncadd [#allocation6], %s40
      %s42 = sshll.u32 [#allocation7], 4
      %s43 = int_to_ptr.vmem [resolvable:$true] %s42
      %48 = dma.hbm_to_vmem [thread:$0]  %s3, 512, %s43, [#allocation6], 128, 128, 8
    $region17: #{tpu_custom_call.1} parent=1 // pred_fallthru
      _
    // Predicated region
    $region18: #{tpu_custom_call.1} parent=1 // pred_check
      _
    $region19: #{tpu_custom_call.1} parent=1 // pred_check_branch
      %50 = sbr.rel (0) target = $region21
    $region20: #{tpu_custom_call.1} parent=1 // pred_region
      _
    $region21: #{tpu_custom_call.1} parent=1 // pred_fallthru
      _
    // Predicated region
    $region22: #{tpu_custom_call.1} parent=1 // pred_check
      _
    $region23: #{tpu_custom_call.1} parent=1 // pred_check_branch
      %52 = sbr.rel (0) target = $region25
    $region24: #{tpu_custom_call.1} parent=1 // pred_region
      %53 = dma.done [#allocation3], 32
    $region25: #{tpu_custom_call.1} parent=1 // pred_fallthru
      _
    // Predicated region
    $region26: #{tpu_custom_call.1} parent=1 // pred_check
      _
    $region27: #{tpu_custom_call.1} parent=1 // pred_check_branch
      %55 = sbr.rel (0) target = $region29
    $region28: #{tpu_custom_call.1} parent=1 // pred_region
      %56 = dma.done [#allocation6], 1024
    $region29: #{tpu_custom_call.1} parent=1 // pred_fallthru
      _
    // Predicated region
    $region30: #{tpu_custom_call.1} parent=1 // pred_check
      _
    $region31: #{tpu_custom_call.1} parent=1 // pred_check_branch
      %58 = sbr.rel (0) target = $region33
    $region32: #{tpu_custom_call.1} parent=1 // pred_region
      %59 = dma.done [#allocation6], 512
    $region33: #{tpu_custom_call.1} parent=1 // pred_fallthru
      _
    %v60 = vld [vmem:[#allocation2] sm:$0x3]
    %v61 = vld [vmem:[#allocation5] sm:$0xff]
    %v62 = vld [vmem:[#allocation5 + $0x8] sm:$0xff]
    %v63 = vld [vmem:[#allocation5 + $0x10] sm:$0xff]
    %v64 = vld [vmem:[#allocation5 + $0x18] sm:$0xff]
    %v65 = vld [vmem:[#allocation5 + $0x20] sm:$0xff]
    %v66 = vld [vmem:[#allocation5 + $0x28] sm:$0xff]
    %v67 = vld [vmem:[#allocation5 + $0x30] sm:$0xff]
    %v68 = vld [vmem:[#allocation5 + $0x38] sm:$0xff]
    %v69 = vld [vmem:[%s1] sm:$0x3]
    %v70 = vld [vmem:[#allocation7] sm:$0xff]
    %v71 = vld [vmem:[#allocation7 + $0x8] sm:$0xff]
    %v72 = vld [vmem:[#allocation7 + $0x10] sm:$0xff]
    %v73 = vld [vmem:[#allocation7 + $0x18] sm:$0xff]
    %vm74 = vcmask 261120
    %v76 = vsel %vm74, %v69, 0
    %78 = vmatprep.subr.mxu0 0.0
    %79 = vmatpush1.msra.mxu0 %v70
    %80 = vmatprep.subr.mxu0 0.0
    %81 = vmatpush1.msra.mxu0 %v71
    %82 = vmatprep.subr.mxu0 0.0
    %83 = vmatpush1.msra.mxu0 %v72
    %84 = vmatprep.subr.mxu0 0.0
    %85 = vmatpush1.msra.mxu0 %v73
    %86 = vmatprep.subr.mxu0 0.0
    %87 = vmatpush1.msra.mxu0 0.0
    %88 = vmatprep.subr.mxu0 0.0
    %89 = vmatpush1.msra.mxu0 0.0
    %90 = vmatprep.subr.mxu0 0.0
    %91 = vmatpush1.msra.mxu0 0.0
    %92 = vmatprep.subr.mxu0 0.0
    %93 = vmatpush1.msra.mxu0 0.0
    %94 = vmatprep.subr.mxu0 0.0
    %95 = vmatpush1.msra.mxu0 0.0
    %96 = vmatprep.subr.mxu0 0.0
    %97 = vmatpush1.msra.mxu0 0.0
    %98 = vmatprep.subr.mxu0 0.0
    %99 = vmatpush1.msra.mxu0 0.0
    %100 = vmatprep.subr.mxu0 0.0
    %101 = vmatpush1.msra.mxu0 0.0
    %102 = vmatprep.subr.mxu0 0.0
    %103 = vmatpush1.msra.mxu0 0.0
    %104 = vmatprep.subr.mxu0 0.0
    %105 = vmatpush1.msra.mxu0 0.0
    %106 = vmatprep.subr.mxu0 0.0
    %107 = vmatpush1.msra.mxu0 0.0
    %108 = vmatprep.subr.mxu0 0.0
    %109 = vmatpush1.msra.mxu0 0.0
    %110 = vmatprep.subr.mxu0 0.0
    %111 = vmatpush1.msra.mxu0 0.0
    %112 = vmatprep.subr.mxu0 0.0
    %113 = vmatpush1.msra.mxu0 0.0
    %114 = vmatprep.subr.mxu0 0.0
    %115 = vmatpush1.msra.mxu0 0.0
    %116 = vmatprep.subr.mxu0 0.0
    %117 = vmatpush1.msra.mxu0 0.0
    %118 = vmatprep.subr.mxu0 0.0
    %119 = vmatpush1.msra.mxu0 0.0
    %120 = vmatprep.subr.mxu0 0.0
    %121 = vmatpush1.msra.mxu0 0.0
    %122 = vmatprep.subr.mxu0 0.0
    %123 = vmatpush1.msra.mxu0 0.0
    %124 = vmatprep.subr.mxu0 0.0
    %125 = vmatpush1.msra.mxu0 0.0
    %126 = vmatprep.subr.mxu0 0.0
    %127 = vmatpush1.msra.mxu0 0.0
    %128 = vmatprep.subr.mxu0 0.0
    %129 = vmatpush1.msra.mxu0 0.0
    %130 = vmatprep.subr.mxu0 0.0
    %131 = vmatpush1.msra.mxu0 0.0
    %132 = vmatprep.subr.mxu0 0.0
    %133 = vmatpush1.msra.mxu0 0.0
    %134 = vmatprep.subr.mxu0 0.0
    %135 = vmatpush1.msra.mxu0 0.0
    %136 = vmatprep.subr.mxu0 0.0
    %137 = vmatpush1.msra.mxu0 0.0
    %138 = vmatprep.subr.mxu0 0.0
    %139 = vmatpush1.msra.mxu0 0.0
    %140 = vmatprep.subr.mxu0 0.0
    %141 = vmatpush1.msra.mxu0 0.0
    %142 = vmatprep.mubr.f32.mxu0 0.0
    %143 = vmatmul.mubr.f32.gmra.mrb[0].mxu0 %v76
    %v144 = vpop.f32.mrb[0].mxu0
    %v145 = vadd.f32 0.0, %v144
    %v146 = vpop.f32.mrb[0].mxu0
    %147 = vdwg.mxu0
    %v148 = vld [vmem:[%s4] sm:$0x1]
    %v150 = vlaneseq
    %v151 = vshrl.u32 %v150, 7
    %v152 = vsub.s32 0, %v151
    %v153 = vrot.slane %v148, %v152
    %vm155 = vcmask 523264
    %v157 = vsel %vm155, %v60, 0
    %159 = vmatprep.subr.mxu0 0.0
    %160 = vmatpush1.msra.mxu0 %v61
    %161 = vmatprep.subr.mxu0 0.0
    %162 = vmatpush1.msra.mxu0 %v62
    %163 = vmatprep.subr.mxu0 0.0
    %164 = vmatpush1.msra.mxu0 %v63
    %165 = vmatprep.subr.mxu0 0.0
    %166 = vmatpush1.msra.mxu0 %v64
    %167 = vmatprep.subr.mxu0 0.0
    %168 = vmatpush1.msra.mxu0 %v65
    %169 = vmatprep.subr.mxu0 0.0
    %170 = vmatpush1.msra.mxu0 %v66
    %171 = vmatprep.subr.mxu0 0.0
    %172 = vmatpush1.msra.mxu0 %v67
    %173 = vmatprep.subr.mxu0 0.0
    %174 = vmatpush1.msra.mxu0 %v68
    %175 = vmatprep.subr.mxu0 0.0
    %176 = vmatpush1.msra.mxu0 0.0
    %177 = vmatprep.subr.mxu0 0.0
    %178 = vmatpush1.msra.mxu0 0.0
    %179 = vmatprep.subr.mxu0 0.0
    %180 = vmatpush1.msra.mxu0 0.0
    %181 = vmatprep.subr.mxu0 0.0
    %182 = vmatpush1.msra.mxu0 0.0
    %183 = vmatprep.subr.mxu0 0.0
    %184 = vmatpush1.msra.mxu0 0.0
    %185 = vmatprep.subr.mxu0 0.0
    %186 = vmatpush1.msra.mxu0 0.0
    %187 = vmatprep.subr.mxu0 0.0
    %188 = vmatpush1.msra.mxu0 0.0
    %189 = vmatprep.subr.mxu0 0.0
    %190 = vmatpush1.msra.mxu0 0.0
    %191 = vmatprep.subr.mxu0 0.0
    %192 = vmatpush1.msra.mxu0 0.0
    %193 = vmatprep.subr.mxu0 0.0
    %194 = vmatpush1.msra.mxu0 0.0
    %195 = vmatprep.subr.mxu0 0.0
    %196 = vmatpush1.msra.mxu0 0.0
    %197 = vmatprep.subr.mxu0 0.0
    %198 = vmatpush1.msra.mxu0 0.0
    %199 = vmatprep.subr.mxu0 0.0
    %200 = vmatpush1.msra.mxu0 0.0
    %201 = vmatprep.subr.mxu0 0.0
    %202 = vmatpush1.msra.mxu0 0.0
    %203 = vmatprep.subr.mxu0 0.0
    %204 = vmatpush1.msra.mxu0 0.0
    %205 = vmatprep.subr.mxu0 0.0
    %206 = vmatpush1.msra.mxu0 0.0
    %207 = vmatprep.subr.mxu0 0.0
    %208 = vmatpush1.msra.mxu0 0.0
    %209 = vmatprep.subr.mxu0 0.0
    %210 = vmatpush1.msra.mxu0 0.0
    %211 = vmatprep.subr.mxu0 0.0
    %212 = vmatpush1.msra.mxu0 0.0
    %213 = vmatprep.subr.mxu0 0.0
    %214 = vmatpush1.msra.mxu0 0.0
    %215 = vmatprep.subr.mxu0 0.0
    %216 = vmatpush1.msra.mxu0 0.0
    %217 = vmatprep.subr.mxu0 0.0
    %218 = vmatpush1.msra.mxu0 0.0
    %219 = vmatprep.subr.mxu0 0.0
    %220 = vmatpush1.msra.mxu0 0.0
    %221 = vmatprep.subr.mxu0 0.0
    %222 = vmatpush1.msra.mxu0 0.0
    %223 = vmatprep.mubr.f32.mxu0 0.0
    %224 = vmatmul.mubr.f32.gmra.mrb[0].mxu0 %v157
    %v225 = vpop.f32.mrb[0].mxu0
    %v226 = vadd.f32 %v153, %v225
    %v227 = vpop.f32.mrb[0].mxu0
    %228 = vdwg.mxu0
    %v229 = vmul.f32 %v145, %v226
    %230 = vst [vmem:[#allocation8] sm:$0x3] %v229
    // Predicated region
    $region34: #{tpu_custom_call.1} parent=1 // pred_check
      _
    $region35: #{tpu_custom_call.1} parent=1 // pred_check_branch
      %232 = sbr.rel (0) target = $region37
    $region36: #{tpu_custom_call.1} parent=1 // pred_region
      %s234 = ssub.s32 32, 32
      %235 = vsyncadd [#allocation4], %s234
      %s237 = sshll.u32 [#allocation8], 4
      %s238 = int_to_ptr.vmem [resolvable:$true] %s237
      %240 = dma.vmem_to_hbm [thread:$0]  %s238, 32, %s5, [#allocation4]
    $region37: #{tpu_custom_call.1} parent=1 // pred_fallthru
      _
    // Predicated region
    $region38: #{tpu_custom_call.1} parent=1 // pred_check
      _
    $region39: #{tpu_custom_call.1} parent=1 // pred_check_branch
      %242 = sbr.rel (0) target = $region41
    $region40: #{tpu_custom_call.1} parent=1 // pred_region
      %243 = dma.done [#allocation4], 32
    $region41: #{tpu_custom_call.1} parent=1 // pred_fallthru
      _
    %244 = vsyncpa [#allocation3], 1
    %245 = vsyncpa [#allocation6], 1
    %246 = vsyncpa [#allocation4], 1

</llo_original>
